<compile_context>
chip_gen: v7x
topology: tpu7x:2x2x1
jax: 0.10.0
libtpu: 0.0.40
codegen_flags: <defaults>
</compile_context>

<pallas_src>
import jax
import jax.numpy as jnp
from jax.experimental import pallas as pl
from jax.experimental.pallas import tpu as pltpu


def _smooth_l1(d):
    # SmoothL1 (beta=1.0) without compare+select:
    #   m = min(|d|, 1);  0.5*m*m + (|d| - m)
    ad = jnp.abs(d)
    m = jnp.minimum(ad, jnp.asarray(1.0, ad.dtype))
    return 0.5 * m * m + (ad - m)


def _hist_retinex_kernel(y_ref, cbcr_ref, gt_ref, out_ref):
    # Blocks: y (B,1,S,128), cbcr (B,2,S,128), gt (B,3,S,128), out (1,1,2,128)
    # Compute dtype: keep bf16 packed arithmetic for bf16 inputs, f32 otherwise.
    if jnp.dtype(gt_ref.dtype) == jnp.dtype(jnp.bfloat16):
        cdt = jnp.bfloat16
    else:
        cdt = jnp.float32

    # Slice channels from the refs before casting (no f32 copy of the full tile).
    r = gt_ref[:, 0].astype(cdt)          # (B, S, 128)
    g = gt_ref[:, 1].astype(cdt)
    b = gt_ref[:, 2].astype(cdt)

    # RGB -> YUV on the VPU (K=3 mat-vec; MXU would be wasted).
    yy = 0.299 * r + 0.587 * g + 0.114 * b
    uu = -0.14713 * r - 0.28886 * g + 0.436 * b
    vv = 0.615 * r - 0.51499 * g - 0.10001 * b

    yb = y_ref[:, 0].astype(cdt)
    cb = cbcr_ref[:, 0].astype(cdt)
    cr = cbcr_ref[:, 1].astype(cdt)

    # smooth-L1 terms; accumulate in f32 regardless of compute dtype.
    ty = _smooth_l1(yb - yy).astype(jnp.float32)
    t1 = _smooth_l1(cb - uu).astype(jnp.float32)
    t2 = _smooth_l1(cr - vv).astype(jnp.float32)

    # Reduce over batch-tile & sublane axes only; keep the 128 lanes dense.
    sy = jnp.sum(ty, axis=(0, 1)).reshape(1, 128)
    sc = jnp.sum(t1 + t2, axis=(0, 1)).reshape(1, 128)

    # Single fused lane-dense store (row 0 = Y partial, row 1 = CbCr partial).
    out_ref[...] = jnp.concatenate([sy, sc], axis=0).reshape(1, 1, 2, 128)


def _round_up(x, m):
    return -(-x // m) * m


def _largest_divisor_leq(n, cap):
    best = 1
    for d in range(1, n + 1):
        if n % d == 0 and d <= cap:
            best = d
    return best


def hist_retinex_loss(y, cbcr, gt):
    """y: (N,1,H,W), cbcr: (N,2,H,W), gt: (N,3,H,W) RGB.  Returns (l_y, l_cbcr)."""
    N, _, H, W = gt.shape
    HW = H * W
    itemsize = jnp.dtype(gt.dtype).itemsize

    # ---- generation-aware per-step input budget ------------------------------
    try:
        vmem_cap = int(pltpu.get_tpu_info().vmem_capacity_bytes)
    except Exception:
        vmem_cap = 64 << 20                      # conservative (v7x-sized) fallback
    target_bytes = min(16 << 20, vmem_cap // 5)  # ~12.8 MB on v7x, 16 MB on v5e/v6e

    # ---- spatial tiling: pad-to-multiple-of-8 rows (no divisor degeneration) -
    rows = -(-HW // 128)                 # spatial rows of 128 lanes (ceil)
    rows8 = _round_up(rows, 8)
    bytes_per_row = 6 * 128 * itemsize   # y + cbcr + gt per spatial row
    target_rows = max(8, (target_bytes // bytes_per_row) // 8 * 8)

    s_tile = min(target_rows, rows8)     # multiple of 8, clamped to budget
    gs = -(-rows // s_tile)

    # ---- batch tiling (only when a whole image fits in one step) -------------
    if gs == 1:
        per_img_bytes = s_tile * bytes_per_row
        b_tile = _largest_divisor_leq(N, max(1, target_bytes // per_img_bytes))
    else:
        b_tile = 1
    gb = N // b_tile

    # ---- megacore balance: keep the parallel grid even when cheap ------------
    if (gb * gs) % 2 == 1 and gs > 1:
        gs += 1
        s_tile = max(8, _round_up(-(-rows // gs), 8))

    rows_pad = gs * s_tile
    pad = rows_pad * 128 - HW

    def prep(x, c):
        x = x.reshape(N, c, HW)
        if pad:
            x = jnp.pad(x, ((0, 0), (0, 0), (0, pad)))
        return x.reshape(N, c, rows_pad, 128)

    y_r = prep(y, 1)
    cbcr_r = prep(cbcr, 2)
    gt_r = prep(gt, 3)

    # ---- VMEM limit derived from the actual buffers (+ headroom) -------------
    in_tile_bytes = b_tile * 6 * s_tile * 128 * itemsize        # one step's inputs
    interm_bytes = b_tile * s_tile * 128 * 4 * 8                # f32 elementwise temps
    out_bytes = 2 * 2 * 128 * 4
    vmem_limit = 2 * in_tile_bytes + interm_bytes + out_bytes + (4 << 20)
    vmem_limit = int(min(vmem_limit, int(vmem_cap * 0.85)))
    vmem_limit = max(vmem_limit, 16 << 20)

    partial = pl.pallas_call(
        _hist_retinex_kernel,
        out_shape=jax.ShapeDtypeStruct((gb, gs, 2, 128), jnp.float32),
        grid_spec=pltpu.PrefetchScalarGridSpec(
            num_scalar_prefetch=0,
            grid=(gb, gs),
            in_specs=[
                pl.BlockSpec((b_tile, 1, s_tile, 128), lambda b, s: (b, 0, s, 0)),
                pl.BlockSpec((b_tile, 2, s_tile, 128), lambda b, s: (b, 0, s, 0)),
                pl.BlockSpec((b_tile, 3, s_tile, 128), lambda b, s: (b, 0, s, 0)),
            ],
            out_specs=pl.BlockSpec((1, 1, 2, 128), lambda b, s: (b, s, 0, 0)),
        ),
        compiler_params=pltpu.CompilerParams(
            dimension_semantics=("parallel", "parallel"),
            vmem_limit_bytes=vmem_limit,
        ),
    )(y_r, cbcr_r, gt_r)

    # Padded pixels contribute exactly 0 to the partial sums, so normalize by
    # the true element counts (SmoothL1Loss default reduction = 'mean').
    count_y = float(N * 1 * HW)
    count_cbcr = float(N * 2 * HW)
    l_y = jnp.sum(partial[:, :, 0, :]) / count_y
    l_cbcr = jnp.sum(partial[:, :, 1, :]) / count_cbcr
    return l_y, l_cbcr


def _reference(y, cbcr, gt):
    r, g, b = gt[:, 0], gt[:, 1], gt[:, 2]
    yy = 0.299 * r + 0.587 * g + 0.114 * b
    uu = -0.14713 * r - 0.28886 * g + 0.436 * b
    vv = 0.615 * r - 0.51499 * g - 0.10001 * b
    gt_yuv = jnp.stack([yy, uu, vv], axis=1)

    def smooth_l1(a, t):
        d = a - t
        ad = jnp.abs(d)
        return jnp.mean(jnp.where(ad < 1.0, 0.5 * ad * ad, ad - 0.5))

    return smooth_l1(y, gt_yuv[:, :1]), smooth_l1(cbcr, gt_yuv[:, 1:])


if __name__ == "__main__":
    key = jax.random.PRNGKey(0)
    k1, k2, k3 = jax.random.split(key, 3)
    N, H, W = 2, 16, 16
    y = jax.random.uniform(k1, (N, 1, H, W), jnp.float32)
    cbcr = jax.random.uniform(k2, (N, 2, H, W), jnp.float32, minval=-0.5, maxval=0.5)
    gt = jax.random.uniform(k3, (N, 3, H, W), jnp.float32)

    l_y, l_cbcr = hist_retinex_loss(y, cbcr, gt)
    jax.block_until_ready((l_y, l_cbcr))

    ref_y, ref_cbcr = _reference(y, cbcr, gt)
    assert jnp.allclose(l_y, ref_y, atol=1e-5), (l_y, ref_y)
    assert jnp.allclose(l_cbcr, ref_cbcr, atol=1e-5), (l_cbcr, ref_cbcr)

    print("KERNEL_OK")
</pallas_src>

<mosaic_0001>
module attributes {stable_mosaic.version = 11 : i64} {
  func.func @_hist_retinex_kernel(%arg0: i32, %arg1: i32, %arg2: memref<2x1x8x128xf32, #tpu.memory_space<vmem>>, %arg3: memref<2x2x8x128xf32, #tpu.memory_space<vmem>>, %arg4: memref<2x3x8x128xf32, #tpu.memory_space<vmem>>, %arg5: memref<1x1x2x128xf32, #tpu.memory_space<vmem>>) attributes {dimension_semantics = [#tpu.dimension_semantics<parallel>, #tpu.dimension_semantics<parallel>], iteration_bounds = array<i64: 1, 1>, scalar_prefetch = 0 : i64, scratch_operands = 0 : i64, tpu.core_type = #tpu.core_type<tc>, window_params = [{transform_indices = @transform_0, window_bounds = array<i64: 2, 1, 8, 128>}, {transform_indices = @transform_1, window_bounds = array<i64: 2, 2, 8, 128>}, {transform_indices = @transform_2, window_bounds = array<i64: 2, 3, 8, 128>}, {transform_indices = @transform_3, window_bounds = array<i64: 1, 1, 2, 128>}]} {
    %c0 = arith.constant 0 : index
    %c0_0 = arith.constant 0 : index
    %c0_1 = arith.constant 0 : index
    %c0_2 = arith.constant 0 : index
    %0 = vector.load %arg4[%c0, %c0_0, %c0_1, %c0_2] : memref<2x3x8x128xf32, #tpu.memory_space<vmem>>, vector<2x1x8x128xf32>
    %1 = vector.shape_cast %0 : vector<2x1x8x128xf32> to vector<2x8x128xf32>
    %c0_3 = arith.constant 0 : index
    %c1 = arith.constant 1 : index
    %c0_4 = arith.constant 0 : index
    %c0_5 = arith.constant 0 : index
    %2 = vector.load %arg4[%c0_3, %c1, %c0_4, %c0_5] : memref<2x3x8x128xf32, #tpu.memory_space<vmem>>, vector<2x1x8x128xf32>
    %3 = vector.shape_cast %2 : vector<2x1x8x128xf32> to vector<2x8x128xf32>
    %c0_6 = arith.constant 0 : index
    %c2 = arith.constant 2 : index
    %c0_7 = arith.constant 0 : index
    %c0_8 = arith.constant 0 : index
    %4 = vector.load %arg4[%c0_6, %c2, %c0_7, %c0_8] : memref<2x3x8x128xf32, #tpu.memory_space<vmem>>, vector<2x1x8x128xf32>
    %5 = vector.shape_cast %4 : vector<2x1x8x128xf32> to vector<2x8x128xf32>
    %cst = arith.constant 2.990000e-01 : f32
    %6 = vector.broadcast %cst : f32 to vector<2x8x128xf32>
    %7 = arith.mulf %6, %1 : vector<2x8x128xf32>
    %cst_9 = arith.constant 5.870000e-01 : f32
    %8 = vector.broadcast %cst_9 : f32 to vector<2x8x128xf32>
    %9 = arith.mulf %8, %3 : vector<2x8x128xf32>
    %10 = arith.addf %7, %9 : vector<2x8x128xf32>
    %cst_10 = arith.constant 1.140000e-01 : f32
    %11 = vector.broadcast %cst_10 : f32 to vector<2x8x128xf32>
    %12 = arith.mulf %11, %5 : vector<2x8x128xf32>
    %13 = arith.addf %10, %12 : vector<2x8x128xf32>
    %cst_11 = arith.constant -1.471300e-01 : f32
    %14 = vector.broadcast %cst_11 : f32 to vector<2x8x128xf32>
    %15 = arith.mulf %14, %1 : vector<2x8x128xf32>
    %cst_12 = arith.constant 2.888600e-01 : f32
    %16 = vector.broadcast %cst_12 : f32 to vector<2x8x128xf32>
    %17 = arith.mulf %16, %3 : vector<2x8x128xf32>
    %18 = arith.subf %15, %17 : vector<2x8x128xf32>
    %cst_13 = arith.constant 4.360000e-01 : f32
    %19 = vector.broadcast %cst_13 : f32 to vector<2x8x128xf32>
    %20 = arith.mulf %19, %5 : vector<2x8x128xf32>
    %21 = arith.addf %18, %20 : vector<2x8x128xf32>
    %cst_14 = arith.constant 6.150000e-01 : f32
    %22 = vector.broadcast %cst_14 : f32 to vector<2x8x128xf32>
    %23 = arith.mulf %22, %1 : vector<2x8x128xf32>
    %cst_15 = arith.constant 5.149900e-01 : f32
    %24 = vector.broadcast %cst_15 : f32 to vector<2x8x128xf32>
    %25 = arith.mulf %24, %3 : vector<2x8x128xf32>
    %26 = arith.subf %23, %25 : vector<2x8x128xf32>
    %cst_16 = arith.constant 1.000100e-01 : f32
    %27 = vector.broadcast %cst_16 : f32 to vector<2x8x128xf32>
    %28 = arith.mulf %27, %5 : vector<2x8x128xf32>
    %29 = arith.subf %26, %28 : vector<2x8x128xf32>
    %c0_17 = arith.constant 0 : index
    %c0_18 = arith.constant 0 : index
    %c0_19 = arith.constant 0 : index
    %c0_20 = arith.constant 0 : index
    %30 = vector.load %arg2[%c0_17, %c0_18, %c0_19, %c0_20] : memref<2x1x8x128xf32, #tpu.memory_space<vmem>>, vector<2x1x8x128xf32>
    %31 = vector.shape_cast %30 : vector<2x1x8x128xf32> to vector<2x8x128xf32>
    %c0_21 = arith.constant 0 : index
    %c0_22 = arith.constant 0 : index
    %c0_23 = arith.constant 0 : index
    %c0_24 = arith.constant 0 : index
    %32 = vector.load %arg3[%c0_21, %c0_22, %c0_23, %c0_24] : memref<2x2x8x128xf32, #tpu.memory_space<vmem>>, vector<2x1x8x128xf32>
    %33 = vector.shape_cast %32 : vector<2x1x8x128xf32> to vector<2x8x128xf32>
    %c0_25 = arith.constant 0 : index
    %c1_26 = arith.constant 1 : index
    %c0_27 = arith.constant 0 : index
    %c0_28 = arith.constant 0 : index
    %34 = vector.load %arg3[%c0_25, %c1_26, %c0_27, %c0_28] : memref<2x2x8x128xf32, #tpu.memory_space<vmem>>, vector<2x1x8x128xf32>
    %35 = vector.shape_cast %34 : vector<2x1x8x128xf32> to vector<2x8x128xf32>
    %36 = arith.subf %31, %13 : vector<2x8x128xf32>
    %37 = math.absf %36 : vector<2x8x128xf32>
    %cst_29 = arith.constant 1.000000e+00 : f32
    %38 = vector.broadcast %cst_29 : f32 to vector<2x8x128xf32>
    %39 = arith.minimumf %37, %38 : vector<2x8x128xf32>
    %cst_30 = arith.constant 5.000000e-01 : f32
    %40 = vector.broadcast %cst_30 : f32 to vector<2x8x128xf32>
    %41 = arith.mulf %40, %39 : vector<2x8x128xf32>
    %42 = arith.mulf %41, %39 : vector<2x8x128xf32>
    %43 = arith.subf %37, %39 : vector<2x8x128xf32>
    %44 = arith.addf %42, %43 : vector<2x8x128xf32>
    %45 = arith.subf %33, %21 : vector<2x8x128xf32>
    %46 = math.absf %45 : vector<2x8x128xf32>
    %cst_31 = arith.constant 1.000000e+00 : f32
    %47 = vector.broadcast %cst_31 : f32 to vector<2x8x128xf32>
    %48 = arith.minimumf %46, %47 : vector<2x8x128xf32>
    %cst_32 = arith.constant 5.000000e-01 : f32
    %49 = vector.broadcast %cst_32 : f32 to vector<2x8x128xf32>
    %50 = arith.mulf %49, %48 : vector<2x8x128xf32>
    %51 = arith.mulf %50, %48 : vector<2x8x128xf32>
    %52 = arith.subf %46, %48 : vector<2x8x128xf32>
    %53 = arith.addf %51, %52 : vector<2x8x128xf32>
    %54 = arith.subf %35, %29 : vector<2x8x128xf32>
    %55 = math.absf %54 : vector<2x8x128xf32>
    %cst_33 = arith.constant 1.000000e+00 : f32
    %56 = vector.broadcast %cst_33 : f32 to vector<2x8x128xf32>
    %57 = arith.minimumf %55, %56 : vector<2x8x128xf32>
    %cst_34 = arith.constant 5.000000e-01 : f32
    %58 = vector.broadcast %cst_34 : f32 to vector<2x8x128xf32>
    %59 = arith.mulf %58, %57 : vector<2x8x128xf32>
    %60 = arith.mulf %59, %57 : vector<2x8x128xf32>
    %61 = arith.subf %55, %57 : vector<2x8x128xf32>
    %62 = arith.addf %60, %61 : vector<2x8x128xf32>
    %cst_35 = arith.constant dense<0.000000e+00> : vector<128xf32>
    %63 = vector.multi_reduction <add>, %44, %cst_35 [0, 1] : vector<2x8x128xf32> to vector<128xf32>
    %64 = vector.shape_cast %63 : vector<128xf32> to vector<1x128xf32>
    %65 = arith.addf %53, %62 : vector<2x8x128xf32>
    %cst_36 = arith.constant dense<0.000000e+00> : vector<128xf32>
    %66 = vector.multi_reduction <add>, %65, %cst_36 [0, 1] : vector<2x8x128xf32> to vector<128xf32>
    %67 = vector.shape_cast %66 : vector<128xf32> to vector<1x128xf32>
    %68 = tpu.concatenate %64, %67 in 0 : vector<1x128xf32>, vector<1x128xf32> -> vector<2x128xf32>
    %69 = vector.shape_cast %68 : vector<2x128xf32> to vector<1x1x2x128xf32>
    %c0_37 = arith.constant 0 : index
    %c0_38 = arith.constant 0 : index
    %c0_39 = arith.constant 0 : index
    %c0_40 = arith.constant 0 : index
    %70 = vector.load %arg5[%c0_37, %c0_38, %c0_39, %c0_40] : memref<1x1x2x128xf32, #tpu.memory_space<vmem>>, vector<1x1x2x128xf32>
    tpu.vector_store %arg5[%c0_37, %c0_38, %c0_39, %c0_40], %69 {strides = array<i32>} : memref<1x1x2x128xf32, #tpu.memory_space<vmem>>, vector<1x1x2x128xf32>,
    return
  }
  func.func @transform_0(%arg0: i32, %arg1: i32) -> (i32, i32, i32, i32) {
    %c0_i32 = arith.constant 0 : i32
    %c0_i32_0 = arith.constant 0 : i32
    %c0_i32_1 = arith.constant 0 : i32
    return %arg0, %c0_i32, %arg1, %c0_i32_0 : i32, i32, i32, i32
  }
  func.func @transform_1(%arg0: i32, %arg1: i32) -> (i32, i32, i32, i32) {
    %c0_i32 = arith.constant 0 : i32
    %c0_i32_0 = arith.constant 0 : i32
    %c0_i32_1 = arith.constant 0 : i32
    return %arg0, %c0_i32, %arg1, %c0_i32_0 : i32, i32, i32, i32
  }
  func.func @transform_2(%arg0: i32, %arg1: i32) -> (i32, i32, i32, i32) {
    %c0_i32 = arith.constant 0 : i32
    %c0_i32_0 = arith.constant 0 : i32
    %c0_i32_1 = arith.constant 0 : i32
    return %arg0, %c0_i32, %arg1, %c0_i32_0 : i32, i32, i32, i32
  }
  func.func @transform_3(%arg0: i32, %arg1: i32) -> (i32, i32, i32, i32) {
    %c0_i32 = arith.constant 0 : i32
    %c0_i32_0 = arith.constant 0 : i32
    %c0_i32_1 = arith.constant 0 : i32
    return %arg0, %arg1, %c0_i32, %c0_i32_0 : i32, i32, i32, i32
  }
}

</mosaic_0001>

<llo_original>
// kernel: tpu_custom_call.1
$region0: #{tpu_custom_call.1}
  #allocation0 [shape = 'u32[]', space=smem, size = 0x4, offset = 0x4, fixed_abs, tag = 'smem constant byte address 0x4 - core index']
  #allocation1 [shape = 'u32[144,128]{1,0:T(1,128)}', space=vmem, size = 0x12000, scoped, tag = 'internal scratch']
  %s0 = inlined_call_operand.hbm [shape: f32[2,1,8,128], index: 0, kind: input, shape index: {}]
  %s1 = inlined_call_operand.hbm [shape: f32[2,2,8,128], index: 1, kind: input, shape index: {}]
  %s2 = inlined_call_operand.hbm [shape: f32[2,3,8,128], index: 2, kind: input, shape index: {}]
  %s3 = inlined_call_operand.hbm [shape: f32[1,1,2,128], index: 3, kind: output, shape index: {}]
  %s4 = sld [smem:[#allocation0]]
  $region34: #{tpu_custom_call.1} parent=0
    _
  %s6 = ssub.s32 1, %s4
  %s7 = scalar_select 0, %s6, %s4
  $region1: #{tpu_custom_call.1} parent=0
    #allocation2 [shape = 'u8[8192]{0}', space=vmem, size = 0x2000, scoped, tag = 'input window, operand 0, single buffered']
    #allocation3 [shape = 's32[1]{0}', space=sflag, size = 0x4, scoped, tag = 'scoped memory for tpu_custom_call.1']
    #allocation4 [shape = 's32[1]{0}', space=sflag, size = 0x4, scoped, tag = 'scoped memory for tpu_custom_call.1']
    #allocation5 [shape = 'u8[16384]{0}', space=vmem, size = 0x4000, scoped, tag = 'input window, operand 1, single buffered']
    #allocation6 [shape = 's32[1]{0}', space=sflag, size = 0x4, scoped, tag = 'scoped memory for tpu_custom_call.1']
    #allocation7 [shape = 'u8[24576]{0}', space=vmem, size = 0x6000, scoped, tag = 'input window, operand 2, single buffered']
    #allocation8 [shape = 'u8[1024]{0}', space=vmem, size = 0x400, scoped, tag = 'output window, operand 0, single buffered']
    %8 = vsyncpa [#allocation3], 0
    %9 = vsyncpa [#allocation6], 0
    %10 = vsyncpa [#allocation4], 0
    // Predicated region
    $region2: #{tpu_custom_call.1} parent=1 // pred_check
      _
    $region3: #{tpu_custom_call.1} parent=1 // pred_check_branch
      %12 = sbr.rel (0) target = $region5
    $region4: #{tpu_custom_call.1} parent=1 // pred_region
      %s14 = ssub.s32 256, 256
      %15 = vsyncadd [#allocation3], %s14
      %s16 = sshll.u32 [#allocation2], 4
      %s17 = int_to_ptr.vmem [resolvable:$true] %s16
      %22 = dma.hbm_to_vmem [thread:$0]  %s0, 256, %s17, [#allocation3], 128, 128, 8
    $region5: #{tpu_custom_call.1} parent=1 // pred_fallthru
      _
    // Predicated region
    $region6: #{tpu_custom_call.1} parent=1 // pred_check
      _
    $region7: #{tpu_custom_call.1} parent=1 // pred_check_branch
      %24 = sbr.rel (0) target = $region9
    $region8: #{tpu_custom_call.1} parent=1 // pred_region
      %s26 = ssub.s32 512, 512
      %27 = vsyncadd [#allocation6], %s26
      %s28 = sshll.u32 [#allocation5], 4
      %s29 = int_to_ptr.vmem [resolvable:$true] %s28
      %34 = dma.hbm_to_vmem [thread:$0]  %s1, 512, %s29, [#allocation6], 128, 128, 8
    $region9: #{tpu_custom_call.1} parent=1 // pred_fallthru
      _
    // Predicated region
    $region10: #{tpu_custom_call.1} parent=1 // pred_check
      _
    $region11: #{tpu_custom_call.1} parent=1 // pred_check_branch
      %36 = sbr.rel (0) target = $region13
    $region12: #{tpu_custom_call.1} parent=1 // pred_region
      %s38 = ssub.s32 768, 768
      %39 = vsyncadd [#allocation6], %s38
      %s40 = sshll.u32 [#allocation7], 4
      %s41 = int_to_ptr.vmem [resolvable:$true] %s40
      %46 = dma.hbm_to_vmem [thread:$0]  %s2, 768, %s41, [#allocation6], 128, 128, 8
    $region13: #{tpu_custom_call.1} parent=1 // pred_fallthru
      _
    // Predicated region
    $region14: #{tpu_custom_call.1} parent=1 // pred_check
      _
    $region15: #{tpu_custom_call.1} parent=1 // pred_check_branch
      %48 = sbr.rel (0) target = $region17
    $region16: #{tpu_custom_call.1} parent=1 // pred_region
      %49 = dma.done [#allocation3], 256
    $region17: #{tpu_custom_call.1} parent=1 // pred_fallthru
      _
    // Predicated region
    $region18: #{tpu_custom_call.1} parent=1 // pred_check
      _
    $region19: #{tpu_custom_call.1} parent=1 // pred_check_branch
      %51 = sbr.rel (0) target = $region21
    $region20: #{tpu_custom_call.1} parent=1 // pred_region
      %52 = dma.done [#allocation6], 512
    $region21: #{tpu_custom_call.1} parent=1 // pred_fallthru
      _
    // Predicated region
    $region22: #{tpu_custom_call.1} parent=1 // pred_check
      _
    $region23: #{tpu_custom_call.1} parent=1 // pred_check_branch
      %54 = sbr.rel (0) target = $region25
    $region24: #{tpu_custom_call.1} parent=1 // pred_region
      %55 = dma.done [#allocation6], 768
    $region25: #{tpu_custom_call.1} parent=1 // pred_fallthru
      _
    %v56 = vld [vmem:[#allocation7] sm:$0xff]
    %v57 = vld [vmem:[#allocation7 + $0x18] sm:$0xff]
    %s58 = scalar_lea.vmem [#allocation7], 8
    %v59 = vld [vmem:[%s58] sm:$0xff]
    %v60 = vld [vmem:[%s58 + $0x18] sm:$0xff]
    %s61 = scalar_lea.vmem [#allocation7], 16
    %v62 = vld [vmem:[%s61] sm:$0xff]
    %v63 = vld [vmem:[%s61 + $0x18] sm:$0xff]
    %v64 = vmul.f32 %v56, 0.299
    %v65 = vmul.f32 %v57, 0.299
    %v66 = vmul.f32 %v59, 0.587
    %v67 = vmul.f32 %v60, 0.587
    %v68 = vadd.f32 %v64, %v66
    %v69 = vadd.f32 %v65, %v67
    %v70 = vmul.f32 %v62, 0.114
    %v71 = vmul.f32 %v63, 0.114
    %v72 = vadd.f32 %v68, %v70
    %v73 = vadd.f32 %v69, %v71
    %v74 = vmul.f32 %v56, -0.14713
    %v75 = vmul.f32 %v57, -0.14713
    %v76 = vmul.f32 %v59, 0.28886
    %v77 = vmul.f32 %v60, 0.28886
    %v78 = vsub.f32 %v74, %v76
    %v79 = vsub.f32 %v75, %v77
    %v80 = vmul.f32 %v62, 0.436
    %v81 = vmul.f32 %v63, 0.436
    %v82 = vadd.f32 %v78, %v80
    %v83 = vadd.f32 %v79, %v81
    %v84 = vmul.f32 %v56, 0.615
    %v85 = vmul.f32 %v57, 0.615
    %v86 = vmul.f32 %v59, 0.51499
    %v87 = vmul.f32 %v60, 0.51499
    %v88 = vsub.f32 %v84, %v86
    %v89 = vsub.f32 %v85, %v87
    %v90 = vmul.f32 %v62, 0.10001
    %v91 = vmul.f32 %v63, 0.10001
    %v92 = vsub.f32 %v88, %v90
    %v93 = vsub.f32 %v89, %v91
    %v94 = vld [vmem:[#allocation2] sm:$0xff]
    %v95 = vld [vmem:[#allocation2 + $0x8] sm:$0xff]
    %v96 = vld [vmem:[#allocation5] sm:$0xff]
    %v97 = vld [vmem:[#allocation5 + $0x10] sm:$0xff]
    %s98 = scalar_lea.vmem [#allocation5], 8
    %v99 = vld [vmem:[%s98] sm:$0xff]
    %v100 = vld [vmem:[%s98 + $0x10] sm:$0xff]
    %v101 = vsub.f32 %v94, %v72
    %v102 = vsub.f32 %v95, %v73
    %v103 = vand.u32 2147483647, %v101
    %v104 = vand.u32 2147483647, %v102
    %v105 = vmin.f32 %v103, 1.0
    %v106 = vmin.f32 %v104, 1.0
    %v107 = vmul.f32 %v105, 0.5
    %v108 = vmul.f32 %v106, 0.5
    %v109 = vmul.f32 %v107, %v105
    %v110 = vmul.f32 %v108, %v106
    %v111 = vsub.f32 %v103, %v105
    %v112 = vsub.f32 %v104, %v106
    %v113 = vadd.f32 %v109, %v111
    %v114 = vadd.f32 %v110, %v112
    %v115 = vsub.f32 %v96, %v82
    %v116 = vsub.f32 %v97, %v83
    %v117 = vand.u32 2147483647, %v115
    %v118 = vand.u32 2147483647, %v116
    %v119 = vmin.f32 %v117, 1.0
    %v120 = vmin.f32 %v118, 1.0
    %v121 = vmul.f32 %v119, 0.5
    %v122 = vmul.f32 %v120, 0.5
    %v123 = vmul.f32 %v121, %v119
    %v124 = vmul.f32 %v122, %v120
    %v125 = vsub.f32 %v117, %v119
    %v126 = vsub.f32 %v118, %v120
    %v127 = vadd.f32 %v123, %v125
    %v128 = vadd.f32 %v124, %v126
    %v129 = vsub.f32 %v99, %v92
    %v130 = vsub.f32 %v100, %v93
    %v131 = vand.u32 2147483647, %v129
    %v132 = vand.u32 2147483647, %v130
    %v133 = vmin.f32 %v131, 1.0
    %v134 = vmin.f32 %v132, 1.0
    %v135 = vmul.f32 %v133, 0.5
    %v136 = vmul.f32 %v134, 0.5
    %v137 = vmul.f32 %v135, %v133
    %v138 = vmul.f32 %v136, %v134
    %v139 = vsub.f32 %v131, %v133
    %v140 = vsub.f32 %v132, %v134
    %v141 = vadd.f32 %v137, %v139
    %v142 = vadd.f32 %v138, %v140
    %v143 = vadd.f32 %v113, %v114
    %v144 = vrot.slane %v143, 4
    %v145 = vadd.f32 %v143, %v144
    %v146 = vrot.slane %v145, 2
    %v147 = vadd.f32 %v145, %v146
    %v148 = vrot.slane %v147, 1
    %v149 = vadd.f32 %v147, %v148
    %v150 = vadd.f32 %v127, %v141
    %v151 = vadd.f32 %v128, %v142
    %v152 = vadd.f32 %v150, %v151
    %v153 = vrot.slane %v152, 4
    %v154 = vadd.f32 %v152, %v153
    %v155 = vrot.slane %v154, 2
    %v156 = vadd.f32 %v154, %v155
    %v157 = vrot.slane %v156, 1
    %v158 = vadd.f32 %v156, %v157
    %vm159 = vcmask 1040384
    %v160 = vsel %vm159, %v149, %v158
    %161 = vst [vmem:[#allocation8] sm:$0x3] %v160
    // Predicated region
    $region26: #{tpu_custom_call.1} parent=1 // pred_check
      _
    $region27: #{tpu_custom_call.1} parent=1 // pred_check_branch
      %163 = sbr.rel (0) target = $region29
    $region28: #{tpu_custom_call.1} parent=1 // pred_region
      %s165 = ssub.s32 32, 32
      %166 = vsyncadd [#allocation4], %s165
      %s168 = sshll.u32 [#allocation8], 4
      %s169 = int_to_ptr.vmem [resolvable:$true] %s168
      %171 = dma.vmem_to_hbm [thread:$0]  %s169, 32, %s3, [#allocation4]
    $region29: #{tpu_custom_call.1} parent=1 // pred_fallthru
      _
    // Predicated region
    $region30: #{tpu_custom_call.1} parent=1 // pred_check
      _
    $region31: #{tpu_custom_call.1} parent=1 // pred_check_branch
      %173 = sbr.rel (0) target = $region33
    $region32: #{tpu_custom_call.1} parent=1 // pred_region
      %174 = dma.done [#allocation4], 32
    $region33: #{tpu_custom_call.1} parent=1 // pred_fallthru
      _
    %175 = vsyncpa [#allocation3], 1
    %176 = vsyncpa [#allocation6], 1
    %177 = vsyncpa [#allocation4], 1

</llo_original>
